<compile_context>
chip_gen: v7x
topology: tpu7x:2x2x1
jax: 0.10.0
libtpu: 0.0.40
codegen_flags: <defaults>
</compile_context>

<pallas_src>
import jax
import jax.numpy as jnp
from jax.experimental import pallas as pl
from jax.experimental.pallas import tpu as pltpu

LANE = 128            # TPU lane width; pad last dims to a multiple of this.
BF16_SUBLANE = 16     # bf16 vreg is (16, 128); pad bf16 batch to 16 rows.
BATCH_TILE = 512      # batch tile for the gridded (large-batch) path.
GRID_THRESHOLD = 1024 # below this, grid-less (launch/step overhead dominates).


def _round_up(n, m):
    return ((n + m - 1) // m) * m


def _mlp_kernel(x_ref,
                w1_ref, b1_ref,
                w2_ref, b2_ref,
                w3_ref, b3_ref,
                w4_ref, b4_ref,
                o_ref):
    # Layer 1: bf16 operands on the MXU, f32 accumulation, f32 bias+ReLU on VPU.
    h = jnp.dot(x_ref[...], w1_ref[...], preferred_element_type=jnp.float32)
    h = jnp.maximum(h + b1_ref[...], 0.0)
    # Layer 2
    h = jnp.dot(h.astype(w2_ref.dtype), w2_ref[...],
                preferred_element_type=jnp.float32)
    h = jnp.maximum(h + b2_ref[...], 0.0)
    # Layer 3
    h = jnp.dot(h.astype(w3_ref.dtype), w3_ref[...],
                preferred_element_type=jnp.float32)
    h = jnp.maximum(h + b3_ref[...], 0.0)
    # Layer 4 (reference applies relu to the output too)
    h = jnp.dot(h.astype(w4_ref.dtype), w4_ref[...],
                preferred_element_type=jnp.float32)
    h = jnp.maximum(h + b4_ref[...], 0.0)
    o_ref[...] = h.astype(o_ref.dtype)


def prepare_params(params, compute_dtype=jnp.bfloat16):
    """One-time prep: pad every W_i to (in_p, out_p) multiples of 128 and cast
    to `compute_dtype`; pad biases to (1, out_p) in f32.  Zero padding is
    exact: zero weight rows/cols + zero bias entries contribute nothing and
    relu(0)=0 keeps padded hidden columns zero through every layer.

    Call this ONCE (not per forward) and reuse the result."""
    in_dim = params[0][0].shape[0]
    out_dim = params[-1][0].shape[1]
    in_p = _round_up(in_dim, LANE)

    flat = []
    prev_p = in_p
    for w, b in params:
        fan_in, fan_out = w.shape
        fan_out_p = _round_up(fan_out, LANE)
        w_p = jnp.zeros((prev_p, fan_out_p), compute_dtype)
        w_p = w_p.at[:fan_in, :fan_out].set(w.astype(compute_dtype))
        b_p = jnp.zeros((1, fan_out_p), jnp.float32)
        b_p = b_p.at[:, :fan_out].set(b.astype(jnp.float32))
        flat.extend([w_p, b_p])
        prev_p = fan_out_p

    meta = {
        "in_dim": in_dim, "out_dim": out_dim,
        "in_p": in_p, "out_p": prev_p,
        "compute_dtype": compute_dtype,
    }
    return tuple(flat), meta


def mlp_forward(x, flat_params, meta):
    """x: (batch, input_dim). flat_params/meta from prepare_params.
    Returns relu-MLP output (batch, output_dim) in x.dtype."""
    batch, in_dim = x.shape
    assert in_dim == meta["in_dim"], (in_dim, meta["in_dim"])
    in_p, out_p, out_dim = meta["in_p"], meta["out_p"], meta["out_dim"]
    cdt = meta["compute_dtype"]

    sub = BF16_SUBLANE if jnp.dtype(cdt) == jnp.dtype(jnp.bfloat16) else 8
    batch_p = max(_round_up(batch, sub), sub)
    use_grid = batch_p >= GRID_THRESHOLD
    if use_grid:
        batch_p = _round_up(batch_p, BATCH_TILE)

    # Only x is padded/cast per call (weights were prepped once).
    x_p = jnp.zeros((batch_p, in_p), cdt)
    x_p = x_p.at[:batch, :in_dim].set(x.astype(cdt))

    out_shape = jax.ShapeDtypeStruct((batch_p, out_p), x.dtype)

    if not use_grid:
        # Grid-less, fully VMEM-resident: padded operands ~0.4 MiB total,
        # far under the scoped VMEM limit on every generation.
        vmem = pl.BlockSpec(memory_space=pltpu.MemorySpace.VMEM)
        out_padded = pl.pallas_call(
            _mlp_kernel,
            out_shape=out_shape,
            in_specs=[vmem] * (1 + len(flat_params)),
            out_specs=vmem,
        )(x_p, *flat_params)
    else:
        # Batch-tiled path: "parallel" axis lets v7x shard tiles over its two
        # TensorCores and bounds per-step VMEM regardless of total batch.
        x_spec = pl.BlockSpec((BATCH_TILE, in_p), lambda i: (i, 0))
        # Weights/biases: full array, constant block index -> resident across
        # grid steps (no re-DMA per tile).
        w_specs = [pl.BlockSpec(arr.shape, lambda i: (0, 0))
                   for arr in flat_params]
        out_spec = pl.BlockSpec((BATCH_TILE, out_p), lambda i: (i, 0))
        out_padded = pl.pallas_call(
            _mlp_kernel,
            out_shape=out_shape,
            grid=(batch_p // BATCH_TILE,),
            in_specs=[x_spec] + w_specs,
            out_specs=out_spec,
            compiler_params=pltpu.CompilerParams(
                dimension_semantics=("parallel",)),
        )(x_p, *flat_params)

    return out_padded[:batch, :out_dim]


def init_params(key, input_dim, output_dim, dtype=jnp.float32):
    """Deterministic init mimicking torch.nn.Linear default
    (U[-1/sqrt(fan_in), +1/sqrt(fan_in)]). Weights stored as (in, out) = W_pt.T."""
    hidden = input_dim * 10
    dims = [(input_dim, hidden), (hidden, hidden),
            (hidden, hidden), (hidden, output_dim)]
    params = []
    for (fan_in, fan_out) in dims:
        key, kw, kb = jax.random.split(key, 3)
        bound = 1.0 / jnp.sqrt(jnp.array(fan_in, dtype))
        w = jax.random.uniform(kw, (fan_in, fan_out), dtype, -bound, bound)
        b = jax.random.uniform(kb, (1, fan_out), dtype, -bound, bound)
        params.append((w, b))
    return params


def reference_forward_f32(x, params):
    h = x
    for w, b in params:
        h = jnp.maximum(h @ w + b, 0.0)
    return h


def reference_forward_bf16(x, params):
    """Matches kernel numerics exactly: bf16 operands, f32 accumulation,
    f32 bias+relu, intermediates rounded to bf16 (final layer kept f32)."""
    h = x.astype(jnp.bfloat16)
    n = len(params)
    for i, (w, b) in enumerate(params):
        h = jnp.dot(h, w.astype(jnp.bfloat16),
                    preferred_element_type=jnp.float32)
        h = jnp.maximum(h + b.astype(jnp.float32), 0.0)
        if i != n - 1:
            h = h.astype(jnp.bfloat16)
    return h.astype(jnp.float32)


if __name__ == "__main__":
    input_dim = 16     # hidden = 160 -> padded to 256 by prepare_params
    output_dim = 8     # padded to 128 by prepare_params

    key = jax.random.PRNGKey(0)
    key, kx_small, kx_big = jax.random.split(key, 3)
    params = init_params(key, input_dim, output_dim)
    flat_params, meta = prepare_params(params)   # one-time padded bf16 weights

    # --- small batch: grid-less path -------------------------------------
    batch = 8
    x = jax.random.normal(kx_small, (batch, input_dim), jnp.float32)
    out = jax.block_until_ready(mlp_forward(x, flat_params, meta))
    assert out.shape == (batch, output_dim)
    assert out.dtype == x.dtype

    ref_bf16 = reference_forward_bf16(x, params)
    assert jnp.allclose(out, ref_bf16, atol=1e-2, rtol=1e-2), (
        jnp.max(jnp.abs(out - ref_bf16)))
    ref_f32 = reference_forward_f32(x, params)
    assert jnp.allclose(out, ref_f32, atol=5e-2, rtol=5e-2), (
        jnp.max(jnp.abs(out - ref_f32)))

    # --- large batch: tiled "parallel" grid path --------------------------
    big_batch = 2048
    xb = jax.random.normal(kx_big, (big_batch, input_dim), jnp.float32)
    out_big = jax.block_until_ready(mlp_forward(xb, flat_params, meta))
    assert out_big.shape == (big_batch, output_dim)
    ref_big = reference_forward_bf16(xb, params)
    assert jnp.allclose(out_big, ref_big, atol=2e-2, rtol=2e-2), (
        jnp.max(jnp.abs(out_big - ref_big)))

    print("KERNEL_OK")
</pallas_src>

<mosaic_0001>
module attributes {stable_mosaic.version = 11 : i64} {
  func.func @_mlp_kernel(%arg0: memref<16x128xbf16, #tpu.memory_space<vmem>>, %arg1: memref<128x256xbf16, #tpu.memory_space<vmem>>, %arg2: memref<1x256xf32, #tpu.memory_space<vmem>>, %arg3: memref<256x256xbf16, #tpu.memory_space<vmem>>, %arg4: memref<1x256xf32, #tpu.memory_space<vmem>>, %arg5: memref<256x256xbf16, #tpu.memory_space<vmem>>, %arg6: memref<1x256xf32, #tpu.memory_space<vmem>>, %arg7: memref<256x128xbf16, #tpu.memory_space<vmem>>, %arg8: memref<1x128xf32, #tpu.memory_space<vmem>>, %arg9: memref<16x128xf32, #tpu.memory_space<vmem>>) attributes {dimension_semantics = [], scalar_prefetch = 0 : i64, scratch_operands = 0 : i64, tpu.core_type = #tpu.core_type<tc>} {
    %c0 = arith.constant 0 : index
    %c0_0 = arith.constant 0 : index
    %0 = vector.load %arg0[%c0, %c0_0] : memref<16x128xbf16, #tpu.memory_space<vmem>>, vector<16x128xbf16>
    %c0_1 = arith.constant 0 : index
    %c0_2 = arith.constant 0 : index
    %1 = vector.load %arg1[%c0_1, %c0_2] : memref<128x256xbf16, #tpu.memory_space<vmem>>, vector<128x256xbf16>
    %cst = arith.constant dense<0.000000e+00> : vector<16x256xf32>
    %2 = tpu.matmul %0, %1, %cst {dimension_numbers = #tpu.dot_dimension_numbers<[1], [0], [0], [1], [0, 0, 1, 1], [], []>} : vector<16x128xbf16>, vector<128x256xbf16>, vector<16x256xf32> -> vector<16x256xf32>
    %c0_3 = arith.constant 0 : index
    %c0_4 = arith.constant 0 : index
    %3 = vector.load %arg2[%c0_3, %c0_4] : memref<1x256xf32, #tpu.memory_space<vmem>>, vector<1x256xf32>
    %4 = vector.broadcast %3 : vector<1x256xf32> to vector<16x256xf32>
    %5 = arith.addf %2, %4 : vector<16x256xf32>
    %cst_5 = arith.constant 0.000000e+00 : f32
    %6 = vector.broadcast %cst_5 : f32 to vector<16x256xf32>
    %7 = arith.maximumf %5, %6 : vector<16x256xf32>
    %8 = arith.truncf %7 : vector<16x256xf32> to vector<16x256xbf16>
    %c0_6 = arith.constant 0 : index
    %c0_7 = arith.constant 0 : index
    %9 = vector.load %arg3[%c0_6, %c0_7] : memref<256x256xbf16, #tpu.memory_space<vmem>>, vector<256x256xbf16>
    %cst_8 = arith.constant dense<0.000000e+00> : vector<16x256xf32>
    %10 = tpu.matmul %8, %9, %cst_8 {dimension_numbers = #tpu.dot_dimension_numbers<[1], [0], [0], [1], [0, 0, 1, 1], [], []>} : vector<16x256xbf16>, vector<256x256xbf16>, vector<16x256xf32> -> vector<16x256xf32>
    %c0_9 = arith.constant 0 : index
    %c0_10 = arith.constant 0 : index
    %11 = vector.load %arg4[%c0_9, %c0_10] : memref<1x256xf32, #tpu.memory_space<vmem>>, vector<1x256xf32>
    %12 = vector.broadcast %11 : vector<1x256xf32> to vector<16x256xf32>
    %13 = arith.addf %10, %12 : vector<16x256xf32>
    %cst_11 = arith.constant 0.000000e+00 : f32
    %14 = vector.broadcast %cst_11 : f32 to vector<16x256xf32>
    %15 = arith.maximumf %13, %14 : vector<16x256xf32>
    %16 = arith.truncf %15 : vector<16x256xf32> to vector<16x256xbf16>
    %c0_12 = arith.constant 0 : index
    %c0_13 = arith.constant 0 : index
    %17 = vector.load %arg5[%c0_12, %c0_13] : memref<256x256xbf16, #tpu.memory_space<vmem>>, vector<256x256xbf16>
    %cst_14 = arith.constant dense<0.000000e+00> : vector<16x256xf32>
    %18 = tpu.matmul %16, %17, %cst_14 {dimension_numbers = #tpu.dot_dimension_numbers<[1], [0], [0], [1], [0, 0, 1, 1], [], []>} : vector<16x256xbf16>, vector<256x256xbf16>, vector<16x256xf32> -> vector<16x256xf32>
    %c0_15 = arith.constant 0 : index
    %c0_16 = arith.constant 0 : index
    %19 = vector.load %arg6[%c0_15, %c0_16] : memref<1x256xf32, #tpu.memory_space<vmem>>, vector<1x256xf32>
    %20 = vector.broadcast %19 : vector<1x256xf32> to vector<16x256xf32>
    %21 = arith.addf %18, %20 : vector<16x256xf32>
    %cst_17 = arith.constant 0.000000e+00 : f32
    %22 = vector.broadcast %cst_17 : f32 to vector<16x256xf32>
    %23 = arith.maximumf %21, %22 : vector<16x256xf32>
    %24 = arith.truncf %23 : vector<16x256xf32> to vector<16x256xbf16>
    %c0_18 = arith.constant 0 : index
    %c0_19 = arith.constant 0 : index
    %25 = vector.load %arg7[%c0_18, %c0_19] : memref<256x128xbf16, #tpu.memory_space<vmem>>, vector<256x128xbf16>
    %cst_20 = arith.constant dense<0.000000e+00> : vector<16x128xf32>
    %26 = tpu.matmul %24, %25, %cst_20 {dimension_numbers = #tpu.dot_dimension_numbers<[1], [0], [0], [1], [0, 0, 1, 1], [], []>} : vector<16x256xbf16>, vector<256x128xbf16>, vector<16x128xf32> -> vector<16x128xf32>
    %c0_21 = arith.constant 0 : index
    %c0_22 = arith.constant 0 : index
    %27 = vector.load %arg8[%c0_21, %c0_22] : memref<1x128xf32, #tpu.memory_space<vmem>>, vector<1x128xf32>
    %28 = vector.broadcast %27 : vector<1x128xf32> to vector<16x128xf32>
    %29 = arith.addf %26, %28 : vector<16x128xf32>
    %cst_23 = arith.constant 0.000000e+00 : f32
    %30 = vector.broadcast %cst_23 : f32 to vector<16x128xf32>
    %31 = arith.maximumf %29, %30 : vector<16x128xf32>
    %c0_24 = arith.constant 0 : index
    %c0_25 = arith.constant 0 : index
    %32 = vector.load %arg9[%c0_24, %c0_25] : memref<16x128xf32, #tpu.memory_space<vmem>>, vector<16x128xf32>
    tpu.vector_store %arg9[%c0_24, %c0_25], %31 {strides = array<i32>} : memref<16x128xf32, #tpu.memory_space<vmem>>, vector<16x128xf32>,
    return
  }
}

</mosaic_0001>

<llo_original>
// kernel: tpu_custom_call.1
$region0: #{tpu_custom_call.1}
  #allocation0 [shape = 'u32[]', space=smem, size = 0x4, offset = 0x4, fixed_abs, tag = 'smem constant byte address 0x4 - core index']
  #allocation1 [shape = 'u32[144,128]{1,0:T(1,128)}', space=vmem, size = 0x12000, scoped, tag = 'internal scratch']
  %s0 = inlined_call_operand.hbm [shape: bf16[16,128], index: 0, kind: input, shape index: {}]
  %s1 = inlined_call_operand.hbm [shape: bf16[128,256], index: 1, kind: input, shape index: {}]
  %s2 = inlined_call_operand.vmem [shape: f32[1,256], index: 2, kind: input, shape index: {}]
  %s3 = inlined_call_operand.hbm [shape: bf16[256,256], index: 3, kind: input, shape index: {}]
  %s4 = inlined_call_operand.vmem [shape: f32[1,256], index: 4, kind: input, shape index: {}]
  %s5 = inlined_call_operand.hbm [shape: bf16[256,256], index: 5, kind: input, shape index: {}]
  %s6 = inlined_call_operand.vmem [shape: f32[1,256], index: 6, kind: input, shape index: {}]
  %s7 = inlined_call_operand.hbm [shape: bf16[256,128], index: 7, kind: input, shape index: {}]
  %s8 = inlined_call_operand.vmem [shape: f32[1,128], index: 8, kind: input, shape index: {}]
  %s9 = inlined_call_operand.hbm [shape: f32[16,128], index: 9, kind: output, shape index: {}]
  %s10 = sld [smem:[#allocation0]]
  $region66: #{tpu_custom_call.1} parent=0
    _
  %s12 = ssub.s32 1, %s10
  %s13 = scalar_select 0, %s12, %s10
  $region1: #{tpu_custom_call.1} parent=0
    #allocation2 [shape = 'u8[4096]{0}', space=vmem, size = 0x1000, scoped, tag = 'input window, operand 0, single buffered']
    #allocation3 [shape = 's32[1]{0}', space=sflag, size = 0x4, scoped, tag = 'scoped memory for tpu_custom_call.1']
    #allocation4 [shape = 's32[1]{0}', space=sflag, size = 0x4, scoped, tag = 'scoped memory for tpu_custom_call.1']
    #allocation5 [shape = 'u8[65536]{0}', space=vmem, size = 0x10000, scoped, tag = 'input window, operand 1, single buffered']
    #allocation6 [shape = 's32[1]{0}', space=sflag, size = 0x4, scoped, tag = 'scoped memory for tpu_custom_call.1']
    #allocation7 [shape = 'u8[131072]{0}', space=vmem, size = 0x20000, scoped, tag = 'input window, operand 3, single buffered']
    #allocation8 [shape = 'u8[131072]{0}', space=vmem, size = 0x20000, scoped, tag = 'input window, operand 5, single buffered']
    #allocation9 [shape = 's32[1]{0}', space=sflag, size = 0x4, scoped, tag = 'scoped memory for tpu_custom_call.1']
    #allocation10 [shape = 'u8[65536]{0}', space=vmem, size = 0x10000, scoped, tag = 'input window, operand 7, single buffered']
    #allocation11 [shape = 'u8[8192]{0}', space=vmem, size = 0x2000, scoped, tag = 'output window, operand 0, single buffered']
    %14 = vsyncpa [#allocation3], 0
    %15 = vsyncpa [#allocation6], 0
    %16 = vsyncpa [#allocation9], 0
    %17 = vsyncpa [#allocation4], 0
    // Predicated region
    $region2: #{tpu_custom_call.1} parent=1 // pred_check
      _
    $region3: #{tpu_custom_call.1} parent=1 // pred_check_branch
      %19 = sbr.rel (0) target = $region5
    $region4: #{tpu_custom_call.1} parent=1 // pred_region
      %s21 = ssub.s32 128, 128
      %22 = vsyncadd [#allocation3], %s21
      %s23 = sshll.u32 [#allocation2], 4
      %s24 = int_to_ptr.vmem [resolvable:$true] %s23
      %29 = dma.hbm_to_vmem [thread:$0]  %s0, 128, %s24, [#allocation3], 64, 64, 4
    $region5: #{tpu_custom_call.1} parent=1 // pred_fallthru
      _
    // Predicated region
    $region6: #{tpu_custom_call.1} parent=1 // pred_check
      _
    $region7: #{tpu_custom_call.1} parent=1 // pred_check_branch
      %31 = sbr.rel (0) target = $region9
    $region8: #{tpu_custom_call.1} parent=1 // pred_region
      %s33 = ssub.s32 2048, 2048
      %34 = vsyncadd [#allocation6], %s33
      %s35 = sshll.u32 [#allocation5], 4
      %s36 = int_to_ptr.vmem [resolvable:$true] %s35
      %41 = dma.hbm_to_vmem [thread:$0]  %s1, 2048, %s36, [#allocation6], 128, 128, 8
    $region9: #{tpu_custom_call.1} parent=1 // pred_fallthru
      _
    // Predicated region
    $region10: #{tpu_custom_call.1} parent=1 // pred_check
      _
    $region11: #{tpu_custom_call.1} parent=1 // pred_check_branch
      %43 = sbr.rel (0) target = $region13
    $region12: #{tpu_custom_call.1} parent=1 // pred_region
      _
    $region13: #{tpu_custom_call.1} parent=1 // pred_fallthru
      _
    // Predicated region
    $region14: #{tpu_custom_call.1} parent=1 // pred_check
      _
    $region15: #{tpu_custom_call.1} parent=1 // pred_check_branch
      %45 = sbr.rel (0) target = $region17
    $region16: #{tpu_custom_call.1} parent=1 // pred_region
      %s47 = ssub.s32 4096, 4096
      %48 = vsyncadd [#allocation6], %s47
      %s49 = sshll.u32 [#allocation7], 4
      %s50 = int_to_ptr.vmem [resolvable:$true] %s49
      %55 = dma.hbm_to_vmem [thread:$0]  %s3, 4096, %s50, [#allocation6], 128, 128, 8
    $region17: #{tpu_custom_call.1} parent=1 // pred_fallthru
      _
    // Predicated region
    $region18: #{tpu_custom_call.1} parent=1 // pred_check
      _
    $region19: #{tpu_custom_call.1} parent=1 // pred_check_branch
      %57 = sbr.rel (0) target = $region21
    $region20: #{tpu_custom_call.1} parent=1 // pred_region
      _
    $region21: #{tpu_custom_call.1} parent=1 // pred_fallthru
      _
    // Predicated region
    $region22: #{tpu_custom_call.1} parent=1 // pred_check
      _
    $region23: #{tpu_custom_call.1} parent=1 // pred_check_branch
      %59 = sbr.rel (0) target = $region25
    $region24: #{tpu_custom_call.1} parent=1 // pred_region
      %s61 = ssub.s32 4096, 4096
      %62 = vsyncadd [#allocation9], %s61
      %s63 = sshll.u32 [#allocation8], 4
      %s64 = int_to_ptr.vmem [resolvable:$true] %s63
      %69 = dma.hbm_to_vmem [thread:$0]  %s5, 4096, %s64, [#allocation9], 128, 128, 8
    $region25: #{tpu_custom_call.1} parent=1 // pred_fallthru
      _
    // Predicated region
    $region26: #{tpu_custom_call.1} parent=1 // pred_check
      _
    $region27: #{tpu_custom_call.1} parent=1 // pred_check_branch
      %71 = sbr.rel (0) target = $region29
    $region28: #{tpu_custom_call.1} parent=1 // pred_region
      _
    $region29: #{tpu_custom_call.1} parent=1 // pred_fallthru
      _
    // Predicated region
    $region30: #{tpu_custom_call.1} parent=1 // pred_check
      _
    $region31: #{tpu_custom_call.1} parent=1 // pred_check_branch
      %73 = sbr.rel (0) target = $region33
    $region32: #{tpu_custom_call.1} parent=1 // pred_region
      %s75 = ssub.s32 2048, 2048
      %76 = vsyncadd [#allocation9], %s75
      %s77 = sshll.u32 [#allocation10], 4
      %s78 = int_to_ptr.vmem [resolvable:$true] %s77
      %83 = dma.hbm_to_vmem [thread:$0]  %s7, 2048, %s78, [#allocation9], 64, 64, 4
    $region33: #{tpu_custom_call.1} parent=1 // pred_fallthru
      _
    // Predicated region
    $region34: #{tpu_custom_call.1} parent=1 // pred_check
      _
    $region35: #{tpu_custom_call.1} parent=1 // pred_check_branch
      %85 = sbr.rel (0) target = $region37
    $region36: #{tpu_custom_call.1} parent=1 // pred_region
      _
    $region37: #{tpu_custom_call.1} parent=1 // pred_fallthru
      _
    // Predicated region
    $region38: #{tpu_custom_call.1} parent=1 // pred_check
      _
    $region39: #{tpu_custom_call.1} parent=1 // pred_check_branch
      %87 = sbr.rel (0) target = $region41
    $region40: #{tpu_custom_call.1} parent=1 // pred_region
      %88 = dma.done [#allocation3], 128
    $region41: #{tpu_custom_call.1} parent=1 // pred_fallthru
      _
    // Predicated region
    $region42: #{tpu_custom_call.1} parent=1 // pred_check
      _
    $region43: #{tpu_custom_call.1} parent=1 // pred_check_branch
      %90 = sbr.rel (0) target = $region45
    $region44: #{tpu_custom_call.1} parent=1 // pred_region
      %91 = dma.done [#allocation6], 2048
    $region45: #{tpu_custom_call.1} parent=1 // pred_fallthru
      _
    // Predicated region
    $region46: #{tpu_custom_call.1} parent=1 // pred_check
      _
    $region47: #{tpu_custom_call.1} parent=1 // pred_check_branch
      %93 = sbr.rel (0) target = $region49
    $region48: #{tpu_custom_call.1} parent=1 // pred_region
      %94 = dma.done [#allocation6], 4096
    $region49: #{tpu_custom_call.1} parent=1 // pred_fallthru
      _
    // Predicated region
    $region50: #{tpu_custom_call.1} parent=1 // pred_check
      _
    $region51: #{tpu_custom_call.1} parent=1 // pred_check_branch
      %96 = sbr.rel (0) target = $region53
    $region52: #{tpu_custom_call.1} parent=1 // pred_region
      %97 = dma.done [#allocation9], 4096
    $region53: #{tpu_custom_call.1} parent=1 // pred_fallthru
      _
    // Predicated region
    $region54: #{tpu_custom_call.1} parent=1 // pred_check
      _
    $region55: #{tpu_custom_call.1} parent=1 // pred_check_branch
      %99 = sbr.rel (0) target = $region57
    $region56: #{tpu_custom_call.1} parent=1 // pred_region
      %100 = dma.done [#allocation9], 2048
    $region57: #{tpu_custom_call.1} parent=1 // pred_fallthru
      _
    %v102 = vld [vmem:[#allocation2] sm:$0xf]
    %v103 = vld [vmem:[#allocation2 + $0x4] sm:$0xf]
    %v104 = vld [vmem:[#allocation5] sm:$0xff]
    %v105 = vld [vmem:[#allocation5 + $0x8] sm:$0xff]
    %v106 = vld [vmem:[#allocation5 + $0x10] sm:$0xff]
    %v107 = vld [vmem:[#allocation5 + $0x18] sm:$0xff]
    %v108 = vld [vmem:[#allocation5 + $0x20] sm:$0xff]
    %v109 = vld [vmem:[#allocation5 + $0x28] sm:$0xff]
    %v110 = vld [vmem:[#allocation5 + $0x30] sm:$0xff]
    %v111 = vld [vmem:[#allocation5 + $0x38] sm:$0xff]
    %v112 = vld [vmem:[#allocation5 + $0x40] sm:$0xff]
    %v113 = vld [vmem:[#allocation5 + $0x48] sm:$0xff]
    %v114 = vld [vmem:[#allocation5 + $0x50] sm:$0xff]
    %v115 = vld [vmem:[#allocation5 + $0x58] sm:$0xff]
    %v116 = vld [vmem:[#allocation5 + $0x60] sm:$0xff]
    %v117 = vld [vmem:[#allocation5 + $0x68] sm:$0xff]
    %v118 = vld [vmem:[#allocation5 + $0x70] sm:$0xff]
    %v119 = vld [vmem:[#allocation5 + $0x78] sm:$0xff]
    %v120 = vld [vmem:[%s2] sm:$0x3]
    %v122 = vlaneseq
    %v123 = vshrl.u32 %v122, 7
    %v124 = vsub.s32 0, %v123
    %v125 = vrot.slane %v120, %v124
    %v126 = vlaneseq
    %v127 = vshrl.u32 %v126, 7
    %v128 = vsub.s32 1, %v127
    %v129 = vrot.slane %v120, %v128
    %v134 = vunpack.c.l.b16 %v102
    %v135 = vunpack.c.l.b16 %v103
    %v136 = vpack.c.b16 %v135, %v134
    %v154 = vunpack.c.l.b16 %v104
    %v155 = vunpack.c.h.b16 %v104
    %v156 = vunpack.c.l.b16 %v105
    %v157 = vunpack.c.h.b16 %v105
    %v158 = vunpack.c.l.b16 %v106
    %v159 = vunpack.c.h.b16 %v106
    %v160 = vunpack.c.l.b16 %v107
    %v161 = vunpack.c.h.b16 %v107
    %v162 = vunpack.c.l.b16 %v108
    %v163 = vunpack.c.h.b16 %v108
    %v164 = vunpack.c.l.b16 %v109
    %v165 = vunpack.c.h.b16 %v109
    %v166 = vunpack.c.l.b16 %v110
    %v167 = vunpack.c.h.b16 %v110
    %v168 = vunpack.c.l.b16 %v111
    %v169 = vunpack.c.h.b16 %v111
    %v170 = vunpack.c.l.b16 %v112
    %v171 = vunpack.c.h.b16 %v112
    %v172 = vunpack.c.l.b16 %v113
    %v173 = vunpack.c.h.b16 %v113
    %v174 = vunpack.c.l.b16 %v114
    %v175 = vunpack.c.h.b16 %v114
    %v176 = vunpack.c.l.b16 %v115
    %v177 = vunpack.c.h.b16 %v115
    %v178 = vunpack.c.l.b16 %v116
    %v179 = vunpack.c.h.b16 %v116
    %v180 = vunpack.c.l.b16 %v117
    %v181 = vunpack.c.h.b16 %v117
    %v182 = vunpack.c.l.b16 %v118
    %v183 = vunpack.c.h.b16 %v118
    %v184 = vunpack.c.l.b16 %v119
    %v185 = vunpack.c.h.b16 %v119
    %v186 = vpack.c.b16 %v156, %v154
    %v187 = vpack.c.b16 %v157, %v155
    %v188 = vpack.c.b16 %v160, %v158
    %v189 = vpack.c.b16 %v161, %v159
    %v190 = vpack.c.b16 %v164, %v162
    %v191 = vpack.c.b16 %v165, %v163
    %v192 = vpack.c.b16 %v168, %v166
    %v193 = vpack.c.b16 %v169, %v167
    %v194 = vpack.c.b16 %v172, %v170
    %v195 = vpack.c.b16 %v173, %v171
    %v196 = vpack.c.b16 %v176, %v174
    %v197 = vpack.c.b16 %v177, %v175
    %v198 = vpack.c.b16 %v180, %v178
    %v199 = vpack.c.b16 %v181, %v179
    %v200 = vpack.c.b16 %v184, %v182
    %v201 = vpack.c.b16 %v185, %v183
    %218 = vmatprep.subr.bf16.mxu0 %v187
    %219 = vmatpush1.bf16.msra.mxu0 %v186
    %220 = vmatprep.subr.bf16.mxu0 %v189
    %221 = vmatpush1.bf16.msra.mxu0 %v188
    %222 = vmatprep.subr.bf16.mxu0 %v191
    %223 = vmatpush1.bf16.msra.mxu0 %v190
    %224 = vmatprep.subr.bf16.mxu0 %v193
    %225 = vmatpush1.bf16.msra.mxu0 %v192
    %226 = vmatprep.subr.bf16.mxu0 %v195
    %227 = vmatpush1.bf16.msra.mxu0 %v194
    %228 = vmatprep.subr.bf16.mxu0 %v197
    %229 = vmatpush1.bf16.msra.mxu0 %v196
    %230 = vmatprep.subr.bf16.mxu0 %v199
    %231 = vmatpush1.bf16.msra.mxu0 %v198
    %232 = vmatprep.subr.bf16.mxu0 %v201
    %233 = vmatpush1.bf16.msra.mxu0 %v200
    %234 = vmatprep.subr.bf16.mxu0 0
    %235 = vmatpush1.bf16.msra.mxu0 0
    %236 = vmatprep.subr.bf16.mxu0 0
    %237 = vmatpush1.bf16.msra.mxu0 0
    %238 = vmatprep.subr.bf16.mxu0 0
    %239 = vmatpush1.bf16.msra.mxu0 0
    %240 = vmatprep.subr.bf16.mxu0 0
    %241 = vmatpush1.bf16.msra.mxu0 0
    %242 = vmatprep.subr.bf16.mxu0 0
    %243 = vmatpush1.bf16.msra.mxu0 0
    %244 = vmatprep.subr.bf16.mxu0 0
    %245 = vmatpush1.bf16.msra.mxu0 0
    %246 = vmatprep.subr.bf16.mxu0 0
    %247 = vmatpush1.bf16.msra.mxu0 0
    %248 = vmatprep.subr.bf16.mxu0 0
    %249 = vmatpush1.bf16.msra.mxu0 0
    %250 = vmatprep.mubr.bf16.mxu0 0
    %251 = vmatmul.mubr.bf16.gmra.mrb[0].mxu0 %v136
    %v252 = vpop.f32.mrb[0].mxu0
    %v253 = vadd.f32 %v125, %v252
    %v254 = vpop.f32.mrb[0].mxu0
    %v255 = vadd.f32 %v129, %v254
    %v256 = vpop.f32.mrb[0].mxu0
    %v257 = vadd.f32 %v125, %v256
    %v258 = vpop.f32.mrb[0].mxu0
    %v259 = vadd.f32 %v129, %v258
    %260 = vdwg.mxu0
    %v261 = vmax.f32 %v253, 0.0
    %v262 = vmax.f32 %v255, 0.0
    %v263 = vmax.f32 %v257, 0.0
    %v264 = vmax.f32 %v259, 0.0
    %v265 = vpack.c.bf16 %v263, %v261
    %v266 = vpack.c.bf16 %v264, %v262
    %v267 = vld [vmem:[#allocation7] sm:$0xff]
    %v268 = vld [vmem:[#allocation7 + $0x8] sm:$0xff]
    %v269 = vld [vmem:[#allocation7 + $0x10] sm:$0xff]
    %v270 = vld [vmem:[#allocation7 + $0x18] sm:$0xff]
    %v271 = vld [vmem:[#allocation7 + $0x20] sm:$0xff]
    %v272 = vld [vmem:[#allocation7 + $0x28] sm:$0xff]
    %v273 = vld [vmem:[#allocation7 + $0x30] sm:$0xff]
    %v274 = vld [vmem:[#allocation7 + $0x38] sm:$0xff]
    %v275 = vld [vmem:[#allocation7 + $0x40] sm:$0xff]
    %v276 = vld [vmem:[#allocation7 + $0x48] sm:$0xff]
    %v277 = vld [vmem:[#allocation7 + $0x50] sm:$0xff]
    %v278 = vld [vmem:[#allocation7 + $0x58] sm:$0xff]
    %v279 = vld [vmem:[#allocation7 + $0x60] sm:$0xff]
    %v280 = vld [vmem:[#allocation7 + $0x68] sm:$0xff]
    %v281 = vld [vmem:[#allocation7 + $0x70] sm:$0xff]
    %v282 = vld [vmem:[#allocation7 + $0x78] sm:$0xff]
    %v283 = vld [vmem:[#allocation7 + $0x80] sm:$0xff]
    %v284 = vld [vmem:[#allocation7 + $0x88] sm:$0xff]
    %v285 = vld [vmem:[#allocation7 + $0x90] sm:$0xff]
    %v286 = vld [vmem:[#allocation7 + $0x98] sm:$0xff]
    %v287 = vld [vmem:[#allocation7 + $0xa0] sm:$0xff]
    %v288 = vld [vmem:[#allocation7 + $0xa8] sm:$0xff]
    %v289 = vld [vmem:[#allocation7 + $0xb0] sm:$0xff]
    %v290 = vld [vmem:[#allocation7 + $0xb8] sm:$0xff]
    %v291 = vld [vmem:[#allocation7 + $0xc0] sm:$0xff]
    %v292 = vld [vmem:[#allocation7 + $0xc8] sm:$0xff]
    %v293 = vld [vmem:[#allocation7 + $0xd0] sm:$0xff]
    %v294 = vld [vmem:[#allocation7 + $0xd8] sm:$0xff]
    %v295 = vld [vmem:[#allocation7 + $0xe0] sm:$0xff]
    %v296 = vld [vmem:[#allocation7 + $0xe8] sm:$0xff]
    %v297 = vld [vmem:[#allocation7 + $0xf0] sm:$0xff]
    %v298 = vld [vmem:[#allocation7 + $0xf8] sm:$0xff]
    %v299 = vld [vmem:[%s4] sm:$0x3]
    %v301 = vlaneseq
    %v302 = vshrl.u32 %v301, 7
    %v303 = vsub.s32 0, %v302
    %v304 = vrot.slane %v299, %v303
    %v305 = vlaneseq
    %v306 = vshrl.u32 %v305, 7
    %v307 = vsub.s32 1, %v306
    %v308 = vrot.slane %v299, %v307
    %v343 = vunpack.c.l.b16 %v267
    %v344 = vunpack.c.h.b16 %v267
    %v345 = vunpack.c.l.b16 %v268
    %v346 = vunpack.c.h.b16 %v268
    %v347 = vunpack.c.l.b16 %v269
    %v348 = vunpack.c.h.b16 %v269
    %v349 = vunpack.c.l.b16 %v270
    %v350 = vunpack.c.h.b16 %v270
    %v351 = vunpack.c.l.b16 %v271
    %v352 = vunpack.c.h.b16 %v271
    %v353 = vunpack.c.l.b16 %v272
    %v354 = vunpack.c.h.b16 %v272
    %v355 = vunpack.c.l.b16 %v273
    %v356 = vunpack.c.h.b16 %v273
    %v357 = vunpack.c.l.b16 %v274
    %v358 = vunpack.c.h.b16 %v274
    %v359 = vunpack.c.l.b16 %v275
    %v360 = vunpack.c.h.b16 %v275
    %v361 = vunpack.c.l.b16 %v276
    %v362 = vunpack.c.h.b16 %v276
    %v363 = vunpack.c.l.b16 %v277
    %v364 = vunpack.c.h.b16 %v277
    %v365 = vunpack.c.l.b16 %v278
    %v366 = vunpack.c.h.b16 %v278
    %v367 = vunpack.c.l.b16 %v279
    %v368 = vunpack.c.h.b16 %v279
    %v369 = vunpack.c.l.b16 %v280
    %v370 = vunpack.c.h.b16 %v280
    %v371 = vunpack.c.l.b16 %v281
    %v372 = vunpack.c.h.b16 %v281
    %v373 = vunpack.c.l.b16 %v282
    %v374 = vunpack.c.h.b16 %v282
    %v375 = vunpack.c.l.b16 %v283
    %v376 = vunpack.c.h.b16 %v283
    %v377 = vunpack.c.l.b16 %v284
    %v378 = vunpack.c.h.b16 %v284
    %v379 = vunpack.c.l.b16 %v285
    %v380 = vunpack.c.h.b16 %v285
    %v381 = vunpack.c.l.b16 %v286
    %v382 = vunpack.c.h.b16 %v286
    %v383 = vunpack.c.l.b16 %v287
    %v384 = vunpack.c.h.b16 %v287
    %v385 = vunpack.c.l.b16 %v288
    %v386 = vunpack.c.h.b16 %v288
    %v387 = vunpack.c.l.b16 %v289
    %v388 = vunpack.c.h.b16 %v289
    %v389 = vunpack.c.l.b16 %v290
    %v390 = vunpack.c.h.b16 %v290
    %v391 = vunpack.c.l.b16 %v291
    %v392 = vunpack.c.h.b16 %v291
    %v393 = vunpack.c.l.b16 %v292
    %v394 = vunpack.c.h.b16 %v292
    %v395 = vunpack.c.l.b16 %v293
    %v396 = vunpack.c.h.b16 %v293
    %v397 = vunpack.c.l.b16 %v294
    %v398 = vunpack.c.h.b16 %v294
    %v399 = vunpack.c.l.b16 %v295
    %v400 = vunpack.c.h.b16 %v295
    %v401 = vunpack.c.l.b16 %v296
    %v402 = vunpack.c.h.b16 %v296
    %v403 = vunpack.c.l.b16 %v297
    %v404 = vunpack.c.h.b16 %v297
    %v405 = vunpack.c.l.b16 %v298
    %v406 = vunpack.c.h.b16 %v298
    %v407 = vpack.c.b16 %v345, %v343
    %v408 = vpack.c.b16 %v346, %v344
    %v409 = vpack.c.b16 %v349, %v347
    %v410 = vpack.c.b16 %v350, %v348
    %v411 = vpack.c.b16 %v353, %v351
    %v412 = vpack.c.b16 %v354, %v352
    %v413 = vpack.c.b16 %v357, %v355
    %v414 = vpack.c.b16 %v358, %v356
    %v415 = vpack.c.b16 %v361, %v359
    %v416 = vpack.c.b16 %v362, %v360
    %v417 = vpack.c.b16 %v365, %v363
    %v418 = vpack.c.b16 %v366, %v364
    %v419 = vpack.c.b16 %v369, %v367
    %v420 = vpack.c.b16 %v370, %v368
    %v421 = vpack.c.b16 %v373, %v371
    %v422 = vpack.c.b16 %v374, %v372
    %v423 = vpack.c.b16 %v377, %v375
    %v424 = vpack.c.b16 %v378, %v376
    %v425 = vpack.c.b16 %v381, %v379
    %v426 = vpack.c.b16 %v382, %v380
    %v427 = vpack.c.b16 %v385, %v383
    %v428 = vpack.c.b16 %v386, %v384
    %v429 = vpack.c.b16 %v389, %v387
    %v430 = vpack.c.b16 %v390, %v388
    %v431 = vpack.c.b16 %v393, %v391
    %v432 = vpack.c.b16 %v394, %v392
    %v433 = vpack.c.b16 %v397, %v395
    %v434 = vpack.c.b16 %v398, %v396
    %v435 = vpack.c.b16 %v401, %v399
    %v436 = vpack.c.b16 %v402, %v400
    %v437 = vpack.c.b16 %v405, %v403
    %v438 = vpack.c.b16 %v406, %v404
    %471 = vmatprep.subr.bf16.mxu0 %v408
    %472 = vmatpush1.bf16.msra.mxu0 %v407
    %473 = vmatprep.subr.bf16.mxu0 %v410
    %474 = vmatpush1.bf16.msra.mxu0 %v409
    %475 = vmatprep.subr.bf16.mxu0 %v412
    %476 = vmatpush1.bf16.msra.mxu0 %v411
    %477 = vmatprep.subr.bf16.mxu0 %v414
    %478 = vmatpush1.bf16.msra.mxu0 %v413
    %479 = vmatprep.subr.bf16.mxu0 %v416
    %480 = vmatpush1.bf16.msra.mxu0 %v415
    %481 = vmatprep.subr.bf16.mxu0 %v418
    %482 = vmatpush1.bf16.msra.mxu0 %v417
    %483 = vmatprep.subr.bf16.mxu0 %v420
    %484 = vmatpush1.bf16.msra.mxu0 %v419
    %485 = vmatprep.subr.bf16.mxu0 %v422
    %486 = vmatpush1.bf16.msra.mxu0 %v421
    %487 = vmatprep.subr.bf16.mxu0 %v424
    %488 = vmatpush1.bf16.msra.mxu0 %v423
    %489 = vmatprep.subr.bf16.mxu0 %v426
    %490 = vmatpush1.bf16.msra.mxu0 %v425
    %491 = vmatprep.subr.bf16.mxu0 %v428
    %492 = vmatpush1.bf16.msra.mxu0 %v427
    %493 = vmatprep.subr.bf16.mxu0 %v430
    %494 = vmatpush1.bf16.msra.mxu0 %v429
    %495 = vmatprep.subr.bf16.mxu0 %v432
    %496 = vmatpush1.bf16.msra.mxu0 %v431
    %497 = vmatprep.subr.bf16.mxu0 %v434
    %498 = vmatpush1.bf16.msra.mxu0 %v433
    %499 = vmatprep.subr.bf16.mxu0 %v436
    %500 = vmatpush1.bf16.msra.mxu0 %v435
    %501 = vmatprep.subr.bf16.mxu0 %v438
    %502 = vmatpush1.bf16.msra.mxu0 %v437
    %503 = vmatprep.mubr.bf16.mxu0 %v266
    %504 = vmatmul.mubr.bf16.gmra.mrb[0].mxu0 %v265
    %v505 = vpop.f32.mrb[0].mxu0
    %v506 = vadd.f32 %v304, %v505
    %v507 = vpop.f32.mrb[0].mxu0
    %v508 = vadd.f32 %v308, %v507
    %v509 = vpop.f32.mrb[0].mxu0
    %v510 = vadd.f32 %v304, %v509
    %v511 = vpop.f32.mrb[0].mxu0
    %v512 = vadd.f32 %v308, %v511
    %513 = vdwg.mxu0
    %v514 = vmax.f32 %v506, 0.0
    %v515 = vmax.f32 %v508, 0.0
    %v516 = vmax.f32 %v510, 0.0
    %v517 = vmax.f32 %v512, 0.0
    %v518 = vpack.c.bf16 %v516, %v514
    %v519 = vpack.c.bf16 %v517, %v515
    %v520 = vld [vmem:[#allocation8] sm:$0xff]
    %v521 = vld [vmem:[#allocation8 + $0x8] sm:$0xff]
    %v522 = vld [vmem:[#allocation8 + $0x10] sm:$0xff]
    %v523 = vld [vmem:[#allocation8 + $0x18] sm:$0xff]
    %v524 = vld [vmem:[#allocation8 + $0x20] sm:$0xff]
    %v525 = vld [vmem:[#allocation8 + $0x28] sm:$0xff]
    %v526 = vld [vmem:[#allocation8 + $0x30] sm:$0xff]
    %v527 = vld [vmem:[#allocation8 + $0x38] sm:$0xff]
    %v528 = vld [vmem:[#allocation8 + $0x40] sm:$0xff]
    %v529 = vld [vmem:[#allocation8 + $0x48] sm:$0xff]
    %v530 = vld [vmem:[#allocation8 + $0x50] sm:$0xff]
    %v531 = vld [vmem:[#allocation8 + $0x58] sm:$0xff]
    %v532 = vld [vmem:[#allocation8 + $0x60] sm:$0xff]
    %v533 = vld [vmem:[#allocation8 + $0x68] sm:$0xff]
    %v534 = vld [vmem:[#allocation8 + $0x70] sm:$0xff]
    %v535 = vld [vmem:[#allocation8 + $0x78] sm:$0xff]
    %v536 = vld [vmem:[#allocation8 + $0x80] sm:$0xff]
    %v537 = vld [vmem:[#allocation8 + $0x88] sm:$0xff]
    %v538 = vld [vmem:[#allocation8 + $0x90] sm:$0xff]
    %v539 = vld [vmem:[#allocation8 + $0x98] sm:$0xff]
    %v540 = vld [vmem:[#allocation8 + $0xa0] sm:$0xff]
    %v541 = vld [vmem:[#allocation8 + $0xa8] sm:$0xff]
    %v542 = vld [vmem:[#allocation8 + $0xb0] sm:$0xff]
    %v543 = vld [vmem:[#allocation8 + $0xb8] sm:$0xff]
    %v544 = vld [vmem:[#allocation8 + $0xc0] sm:$0xff]
    %v545 = vld [vmem:[#allocation8 + $0xc8] sm:$0xff]
    %v546 = vld [vmem:[#allocation8 + $0xd0] sm:$0xff]
    %v547 = vld [vmem:[#allocation8 + $0xd8] sm:$0xff]
    %v548 = vld [vmem:[#allocation8 + $0xe0] sm:$0xff]
    %v549 = vld [vmem:[#allocation8 + $0xe8] sm:$0xff]
    %v550 = vld [vmem:[#allocation8 + $0xf0] sm:$0xff]
    %v551 = vld [vmem:[#allocation8 + $0xf8] sm:$0xff]
    %v552 = vld [vmem:[%s6] sm:$0x3]
    %v554 = vlaneseq
    %v555 = vshrl.u32 %v554, 7
    %v556 = vsub.s32 0, %v555
    %v557 = vrot.slane %v552, %v556
    %v558 = vlaneseq
    %v559 = vshrl.u32 %v558, 7
    %v560 = vsub.s32 1, %v559
    %v561 = vrot.slane %v552, %v560
    %v596 = vunpack.c.l.b16 %v520
    %v597 = vunpack.c.h.b16 %v520
    %v598 = vunpack.c.l.b16 %v521
    %v599 = vunpack.c.h.b16 %v521
    %v600 = vunpack.c.l.b16 %v522
    %v601 = vunpack.c.h.b16 %v522
    %v602 = vunpack.c.l.b16 %v523
    %v603 = vunpack.c.h.b16 %v523
    %v604 = vunpack.c.l.b16 %v524
    %v605 = vunpack.c.h.b16 %v524
    %v606 = vunpack.c.l.b16 %v525
    %v607 = vunpack.c.h.b16 %v525
    %v608 = vunpack.c.l.b16 %v526
    %v609 = vunpack.c.h.b16 %v526
    %v610 = vunpack.c.l.b16 %v527
    %v611 = vunpack.c.h.b16 %v527
    %v612 = vunpack.c.l.b16 %v528
    %v613 = vunpack.c.h.b16 %v528
    %v614 = vunpack.c.l.b16 %v529
    %v615 = vunpack.c.h.b16 %v529
    %v616 = vunpack.c.l.b16 %v530
    %v617 = vunpack.c.h.b16 %v530
    %v618 = vunpack.c.l.b16 %v531
    %v619 = vunpack.c.h.b16 %v531
    %v620 = vunpack.c.l.b16 %v532
    %v621 = vunpack.c.h.b16 %v532
    %v622 = vunpack.c.l.b16 %v533
    %v623 = vunpack.c.h.b16 %v533
    %v624 = vunpack.c.l.b16 %v534
    %v625 = vunpack.c.h.b16 %v534
    %v626 = vunpack.c.l.b16 %v535
    %v627 = vunpack.c.h.b16 %v535
    %v628 = vunpack.c.l.b16 %v536
    %v629 = vunpack.c.h.b16 %v536
    %v630 = vunpack.c.l.b16 %v537
    %v631 = vunpack.c.h.b16 %v537
    %v632 = vunpack.c.l.b16 %v538
    %v633 = vunpack.c.h.b16 %v538
    %v634 = vunpack.c.l.b16 %v539
    %v635 = vunpack.c.h.b16 %v539
    %v636 = vunpack.c.l.b16 %v540
    %v637 = vunpack.c.h.b16 %v540
    %v638 = vunpack.c.l.b16 %v541
    %v639 = vunpack.c.h.b16 %v541
    %v640 = vunpack.c.l.b16 %v542
    %v641 = vunpack.c.h.b16 %v542
    %v642 = vunpack.c.l.b16 %v543
    %v643 = vunpack.c.h.b16 %v543
    %v644 = vunpack.c.l.b16 %v544
    %v645 = vunpack.c.h.b16 %v544
    %v646 = vunpack.c.l.b16 %v545
    %v647 = vunpack.c.h.b16 %v545
    %v648 = vunpack.c.l.b16 %v546
    %v649 = vunpack.c.h.b16 %v546
    %v650 = vunpack.c.l.b16 %v547
    %v651 = vunpack.c.h.b16 %v547
    %v652 = vunpack.c.l.b16 %v548
    %v653 = vunpack.c.h.b16 %v548
    %v654 = vunpack.c.l.b16 %v549
    %v655 = vunpack.c.h.b16 %v549
    %v656 = vunpack.c.l.b16 %v550
    %v657 = vunpack.c.h.b16 %v550
    %v658 = vunpack.c.l.b16 %v551
    %v659 = vunpack.c.h.b16 %v551
    %v660 = vpack.c.b16 %v598, %v596
    %v661 = vpack.c.b16 %v599, %v597
    %v662 = vpack.c.b16 %v602, %v600
    %v663 = vpack.c.b16 %v603, %v601
    %v664 = vpack.c.b16 %v606, %v604
    %v665 = vpack.c.b16 %v607, %v605
    %v666 = vpack.c.b16 %v610, %v608
    %v667 = vpack.c.b16 %v611, %v609
    %v668 = vpack.c.b16 %v614, %v612
    %v669 = vpack.c.b16 %v615, %v613
    %v670 = vpack.c.b16 %v618, %v616
    %v671 = vpack.c.b16 %v619, %v617
    %v672 = vpack.c.b16 %v622, %v620
    %v673 = vpack.c.b16 %v623, %v621
    %v674 = vpack.c.b16 %v626, %v624
    %v675 = vpack.c.b16 %v627, %v625
    %v676 = vpack.c.b16 %v630, %v628
    %v677 = vpack.c.b16 %v631, %v629
    %v678 = vpack.c.b16 %v634, %v632
    %v679 = vpack.c.b16 %v635, %v633
    %v680 = vpack.c.b16 %v638, %v636
    %v681 = vpack.c.b16 %v639, %v637
    %v682 = vpack.c.b16 %v642, %v640
    %v683 = vpack.c.b16 %v643, %v641
    %v684 = vpack.c.b16 %v646, %v644
    %v685 = vpack.c.b16 %v647, %v645
    %v686 = vpack.c.b16 %v650, %v648
    %v687 = vpack.c.b16 %v651, %v649
    %v688 = vpack.c.b16 %v654, %v652
    %v689 = vpack.c.b16 %v655, %v653
    %v690 = vpack.c.b16 %v658, %v656
    %v691 = vpack.c.b16 %v659, %v657
    %724 = vmatprep.subr.bf16.mxu0 %v661
    %725 = vmatpush1.bf16.msra.mxu0 %v660
    %726 = vmatprep.subr.bf16.mxu0 %v663
    %727 = vmatpush1.bf16.msra.mxu0 %v662
    %728 = vmatprep.subr.bf16.mxu0 %v665
    %729 = vmatpush1.bf16.msra.mxu0 %v664
    %730 = vmatprep.subr.bf16.mxu0 %v667
    %731 = vmatpush1.bf16.msra.mxu0 %v666
    %732 = vmatprep.subr.bf16.mxu0 %v669
    %733 = vmatpush1.bf16.msra.mxu0 %v668
    %734 = vmatprep.subr.bf16.mxu0 %v671
    %735 = vmatpush1.bf16.msra.mxu0 %v670
    %736 = vmatprep.subr.bf16.mxu0 %v673
    %737 = vmatpush1.bf16.msra.mxu0 %v672
    %738 = vmatprep.subr.bf16.mxu0 %v675
    %739 = vmatpush1.bf16.msra.mxu0 %v674
    %740 = vmatprep.subr.bf16.mxu0 %v677
    %741 = vmatpush1.bf16.msra.mxu0 %v676
    %742 = vmatprep.subr.bf16.mxu0 %v679
    %743 = vmatpush1.bf16.msra.mxu0 %v678
    %744 = vmatprep.subr.bf16.mxu0 %v681
    %745 = vmatpush1.bf16.msra.mxu0 %v680
    %746 = vmatprep.subr.bf16.mxu0 %v683
    %747 = vmatpush1.bf16.msra.mxu0 %v682
    %748 = vmatprep.subr.bf16.mxu0 %v685
    %749 = vmatpush1.bf16.msra.mxu0 %v684
    %750 = vmatprep.subr.bf16.mxu0 %v687
    %751 = vmatpush1.bf16.msra.mxu0 %v686
    %752 = vmatprep.subr.bf16.mxu0 %v689
    %753 = vmatpush1.bf16.msra.mxu0 %v688
    %754 = vmatprep.subr.bf16.mxu0 %v691
    %755 = vmatpush1.bf16.msra.mxu0 %v690
    %756 = vmatprep.mubr.bf16.mxu0 %v519
    %757 = vmatmul.mubr.bf16.gmra.mrb[0].mxu0 %v518
    %v758 = vpop.f32.mrb[0].mxu0
    %v759 = vadd.f32 %v557, %v758
    %v760 = vpop.f32.mrb[0].mxu0
    %v761 = vadd.f32 %v561, %v760
    %v762 = vpop.f32.mrb[0].mxu0
    %v763 = vadd.f32 %v557, %v762
    %v764 = vpop.f32.mrb[0].mxu0
    %v765 = vadd.f32 %v561, %v764
    %766 = vdwg.mxu0
    %v767 = vmax.f32 %v759, 0.0
    %v768 = vmax.f32 %v761, 0.0
    %v769 = vmax.f32 %v763, 0.0
    %v770 = vmax.f32 %v765, 0.0
    %v771 = vpack.c.bf16 %v769, %v767
    %v772 = vpack.c.bf16 %v770, %v768
    %v773 = vld [vmem:[#allocation10] sm:$0xf]
    %v774 = vld [vmem:[#allocation10 + $0x4] sm:$0xf]
    %v775 = vld [vmem:[#allocation10 + $0x8] sm:$0xf]
    %v776 = vld [vmem:[#allocation10 + $0xc] sm:$0xf]
    %v777 = vld [vmem:[#allocation10 + $0x10] sm:$0xf]
    %v778 = vld [vmem:[#allocation10 + $0x14] sm:$0xf]
    %v779 = vld [vmem:[#allocation10 + $0x18] sm:$0xf]
    %v780 = vld [vmem:[#allocation10 + $0x1c] sm:$0xf]
    %v781 = vld [vmem:[#allocation10 + $0x20] sm:$0xf]
    %v782 = vld [vmem:[#allocation10 + $0x24] sm:$0xf]
    %v783 = vld [vmem:[#allocation10 + $0x28] sm:$0xf]
    %v784 = vld [vmem:[#allocation10 + $0x2c] sm:$0xf]
    %v785 = vld [vmem:[#allocation10 + $0x30] sm:$0xf]
    %v786 = vld [vmem:[#allocation10 + $0x34] sm:$0xf]
    %v787 = vld [vmem:[#allocation10 + $0x38] sm:$0xf]
    %v788 = vld [vmem:[#allocation10 + $0x3c] sm:$0xf]
    %v789 = vld [vmem:[#allocation10 + $0x40] sm:$0xf]
    %v790 = vld [vmem:[#allocation10 + $0x44] sm:$0xf]
    %v791 = vld [vmem:[#allocation10 + $0x48] sm:$0xf]
    %v792 = vld [vmem:[#allocation10 + $0x4c] sm:$0xf]
    %v793 = vld [vmem:[#allocation10 + $0x50] sm:$0xf]
    %v794 = vld [vmem:[#allocation10 + $0x54] sm:$0xf]
    %v795 = vld [vmem:[#allocation10 + $0x58] sm:$0xf]
    %v796 = vld [vmem:[#allocation10 + $0x5c] sm:$0xf]
    %v797 = vld [vmem:[#allocation10 + $0x60] sm:$0xf]
    %v798 = vld [vmem:[#allocation10 + $0x64] sm:$0xf]
    %v799 = vld [vmem:[#allocation10 + $0x68] sm:$0xf]
    %v800 = vld [vmem:[#allocation10 + $0x6c] sm:$0xf]
    %v801 = vld [vmem:[#allocation10 + $0x70] sm:$0xf]
    %v802 = vld [vmem:[#allocation10 + $0x74] sm:$0xf]
    %v803 = vld [vmem:[#allocation10 + $0x78] sm:$0xf]
    %v804 = vld [vmem:[#allocation10 + $0x7c] sm:$0xf]
    %v805 = vld [vmem:[%s8] sm:$0x1]
    %v807 = vlaneseq
    %v808 = vshrl.u32 %v807, 7
    %v809 = vsub.s32 0, %v808
    %v810 = vrot.slane %v805, %v809
    %v844 = vunpack.c.l.b16 %v773
    %v845 = vunpack.c.l.b16 %v774
    %v846 = vunpack.c.l.b16 %v775
    %v847 = vunpack.c.l.b16 %v776
    %v848 = vunpack.c.l.b16 %v777
    %v849 = vunpack.c.l.b16 %v778
    %v850 = vunpack.c.l.b16 %v779
    %v851 = vunpack.c.l.b16 %v780
    %v852 = vunpack.c.l.b16 %v781
    %v853 = vunpack.c.l.b16 %v782
    %v854 = vunpack.c.l.b16 %v783
    %v855 = vunpack.c.l.b16 %v784
    %v856 = vunpack.c.l.b16 %v785
    %v857 = vunpack.c.l.b16 %v786
    %v858 = vunpack.c.l.b16 %v787
    %v859 = vunpack.c.l.b16 %v788
    %v860 = vunpack.c.l.b16 %v789
    %v861 = vunpack.c.l.b16 %v790
    %v862 = vunpack.c.l.b16 %v791
    %v863 = vunpack.c.l.b16 %v792
    %v864 = vunpack.c.l.b16 %v793
    %v865 = vunpack.c.l.b16 %v794
    %v866 = vunpack.c.l.b16 %v795
    %v867 = vunpack.c.l.b16 %v796
    %v868 = vunpack.c.l.b16 %v797
    %v869 = vunpack.c.l.b16 %v798
    %v870 = vunpack.c.l.b16 %v799
    %v871 = vunpack.c.l.b16 %v800
    %v872 = vunpack.c.l.b16 %v801
    %v873 = vunpack.c.l.b16 %v802
    %v874 = vunpack.c.l.b16 %v803
    %v875 = vunpack.c.l.b16 %v804
    %v876 = vpack.c.b16 %v845, %v844
    %v877 = vpack.c.b16 %v847, %v846
    %v878 = vpack.c.b16 %v849, %v848
    %v879 = vpack.c.b16 %v851, %v850
    %v880 = vpack.c.b16 %v853, %v852
    %v881 = vpack.c.b16 %v855, %v854
    %v882 = vpack.c.b16 %v857, %v856
    %v883 = vpack.c.b16 %v859, %v858
    %v884 = vpack.c.b16 %v861, %v860
    %v885 = vpack.c.b16 %v863, %v862
    %v886 = vpack.c.b16 %v865, %v864
    %v887 = vpack.c.b16 %v867, %v866
    %v888 = vpack.c.b16 %v869, %v868
    %v889 = vpack.c.b16 %v871, %v870
    %v890 = vpack.c.b16 %v873, %v872
    %v891 = vpack.c.b16 %v875, %v874
    %908 = vmatprep.subr.bf16.mxu0 0
    %909 = vmatpush1.bf16.msra.mxu0 %v876
    %910 = vmatprep.subr.bf16.mxu0 0
    %911 = vmatpush1.bf16.msra.mxu0 %v877
    %912 = vmatprep.subr.bf16.mxu0 0
    %913 = vmatpush1.bf16.msra.mxu0 %v878
    %914 = vmatprep.subr.bf16.mxu0 0
    %915 = vmatpush1.bf16.msra.mxu0 %v879
    %916 = vmatprep.subr.bf16.mxu0 0
    %917 = vmatpush1.bf16.msra.mxu0 %v880
    %918 = vmatprep.subr.bf16.mxu0 0
    %919 = vmatpush1.bf16.msra.mxu0 %v881
    %920 = vmatprep.subr.bf16.mxu0 0
    %921 = vmatpush1.bf16.msra.mxu0 %v882
    %922 = vmatprep.subr.bf16.mxu0 0
    %923 = vmatpush1.bf16.msra.mxu0 %v883
    %924 = vmatprep.subr.bf16.mxu0 0
    %925 = vmatpush1.bf16.msra.mxu0 %v884
    %926 = vmatprep.subr.bf16.mxu0 0
    %927 = vmatpush1.bf16.msra.mxu0 %v885
    %928 = vmatprep.subr.bf16.mxu0 0
    %929 = vmatpush1.bf16.msra.mxu0 %v886
    %930 = vmatprep.subr.bf16.mxu0 0
    %931 = vmatpush1.bf16.msra.mxu0 %v887
    %932 = vmatprep.subr.bf16.mxu0 0
    %933 = vmatpush1.bf16.msra.mxu0 %v888
    %934 = vmatprep.subr.bf16.mxu0 0
    %935 = vmatpush1.bf16.msra.mxu0 %v889
    %936 = vmatprep.subr.bf16.mxu0 0
    %937 = vmatpush1.bf16.msra.mxu0 %v890
    %938 = vmatprep.subr.bf16.mxu0 0
    %939 = vmatpush1.bf16.msra.mxu0 %v891
    %940 = vmatprep.mubr.bf16.mxu0 %v772
    %941 = vmatmul.mubr.bf16.gmra.mrb[0].mxu0 %v771
    %v942 = vpop.f32.mrb[0].mxu0
    %v943 = vadd.f32 %v810, %v942
    %v944 = vpop.f32.mrb[0].mxu0
    %v945 = vpop.f32.mrb[0].mxu0
    %v946 = vadd.f32 %v810, %v945
    %v947 = vpop.f32.mrb[0].mxu0
    %948 = vdwg.mxu0
    %v949 = vmax.f32 %v943, 0.0
    %v950 = vmax.f32 %v946, 0.0
    %951 = vst [vmem:[#allocation11] sm:$0xff] %v949
    %952 = vst [vmem:[#allocation11 + $0x8] sm:$0xff] %v950
    // Predicated region
    $region58: #{tpu_custom_call.1} parent=1 // pred_check
      _
    $region59: #{tpu_custom_call.1} parent=1 // pred_check_branch
      %954 = sbr.rel (0) target = $region61
    $region60: #{tpu_custom_call.1} parent=1 // pred_region
      %s956 = ssub.s32 256, 256
      %957 = vsyncadd [#allocation4], %s956
      %s958 = sshll.u32 [#allocation11], 4
      %s959 = int_to_ptr.vmem [resolvable:$true] %s958
      %964 = dma.vmem_to_hbm [thread:$0]  %s959, 256, %s9, [#allocation4], 128, 128, 8
    $region61: #{tpu_custom_call.1} parent=1 // pred_fallthru
      _
    // Predicated region
    $region62: #{tpu_custom_call.1} parent=1 // pred_check
      _
    $region63: #{tpu_custom_call.1} parent=1 // pred_check_branch
      %966 = sbr.rel (0) target = $region65
    $region64: #{tpu_custom_call.1} parent=1 // pred_region
      %967 = dma.done [#allocation4], 256
    $region65: #{tpu_custom_call.1} parent=1 // pred_fallthru
      _
    %968 = vsyncpa [#allocation3], 1
    %969 = vsyncpa [#allocation6], 1
    %970 = vsyncpa [#allocation9], 1
    %971 = vsyncpa [#allocation4], 1

</llo_original>
